<compile_context>
chip_gen: v7x
topology: tpu7x:2x2x1
jax: 0.10.0
libtpu: 0.0.40
codegen_flags: <defaults>
</compile_context>

<pallas_src>
import functools
import math

import jax
import jax.numpy as jnp
from jax.experimental import pallas as pl
from jax.experimental.pallas import tpu as pltpu


def _sigmoid(x):
    # Written with exp explicitly so it lowers via the EUP without relying on
    # a lax.logistic lowering rule.
    return 1.0 / (1.0 + jnp.exp(-x))


# ----------------------------------------------------------------------------
# Kernels
# ----------------------------------------------------------------------------

def _input_proj_kernel(x_ref, wx_ref, b_ref, out_ref):
    """pre_x = x @ Wx + b for all T*B rows in one lane-dense matmul."""
    x = x_ref[...].astype(wx_ref.dtype)           # bf16 MXU path if weights are bf16
    out_ref[...] = (jnp.dot(x, wx_ref[...], preferred_element_type=jnp.float32)
                    + b_ref[...]).astype(out_ref.dtype)


def _lstm_cell_kernel(xh_ref, c_ref, w_ref, b_ref, h_out_ref, c_out_ref, *,
                      hidden_size):
    """Single LSTM step: one fused (B, in+H) x (in+H, 4H) matmul -> gates."""
    H = hidden_size
    c = c_ref[...].astype(jnp.float32)
    xh = xh_ref[...].astype(w_ref.dtype)

    pre = (jnp.dot(xh, w_ref[...], preferred_element_type=jnp.float32)
           + b_ref[...])                          # (B, 4H), gates [i, f, o | g]

    sig = _sigmoid(pre[:, 0:3 * H])               # one contiguous (B, 3H) sigmoid
    i_t = sig[:, 0:H]
    f_t = sig[:, H:2 * H]
    o_t = sig[:, 2 * H:3 * H]
    g_t = jnp.tanh(pre[:, 3 * H:4 * H])

    c_new = f_t * c + i_t * g_t
    h_new = o_t * jnp.tanh(c_new)

    h_out_ref[...] = h_new.astype(h_out_ref.dtype)
    c_out_ref[...] = c_new.astype(c_out_ref.dtype)


def _lstm_seq_kernel(prex_ref, h0_ref, c0_ref, wh_ref,
                     h_slab_ref, c_out_ref, h_scr, c_scr, *,
                     hidden_size, chunk):
    """One grid step = `chunk` timesteps of the recurrence (statically unrolled).

    prex_ref : (chunk, B, 4H)  precomputed x@Wx + b for these timesteps
    wh_ref   : (H, 4H)         resident across the whole grid
    h/c_scr  : (B, H) f32      carried state across grid steps
    h_slab_ref: (1, B, chunk*H) lane-dense output slab for this chunk
    """
    H = hidden_size
    t = pl.program_id(0)

    @pl.when(t == 0)
    def _():
        h_scr[...] = h0_ref[...].astype(jnp.float32)
        c_scr[...] = c0_ref[...].astype(jnp.float32)

    wh = wh_ref[...]
    h = h_scr[...]
    c = c_scr[...]

    hs = []
    for j in range(chunk):                        # static unroll -> static slices
        pre = prex_ref[j].astype(jnp.float32) + jnp.dot(
            h.astype(wh.dtype), wh, preferred_element_type=jnp.float32)
        sig = _sigmoid(pre[:, 0:3 * H])           # gates packed [i, f, o | g]
        i_t = sig[:, 0:H]
        f_t = sig[:, H:2 * H]
        o_t = sig[:, 2 * H:3 * H]
        g_t = jnp.tanh(pre[:, 3 * H:4 * H])
        c = f_t * c + i_t * g_t
        h = o_t * jnp.tanh(c)
        hs.append(h)

    h_scr[...] = h
    c_scr[...] = c

    # Lane-dense writeback: one (B, chunk*H) store / HBM block per chunk.
    h_slab_ref[0] = jnp.concatenate(hs, axis=1).astype(h_slab_ref.dtype)

    @pl.when(t == pl.num_programs(0) - 1)
    def _():
        c_out_ref[...] = c.astype(c_out_ref.dtype)


# ----------------------------------------------------------------------------
# Wrappers
# ----------------------------------------------------------------------------

def pack_lstm_params(params, weight_dtype=jnp.float32):
    """Pack per-gate weights once. Gate order along the 4H axis: [i, f, o, g].

    Weights may be cast to bf16 (MXU-native, halves residency / DMA bytes);
    the bias and all gate / cell-state math stay in f32.
    """
    wx = jnp.concatenate([params["W_xi"], params["W_xf"],
                          params["W_xo"], params["W_xc"]], axis=1).astype(weight_dtype)
    wh = jnp.concatenate([params["W_hi"], params["W_hf"],
                          params["W_ho"], params["W_hc"]], axis=1).astype(weight_dtype)
    b = jnp.concatenate([params["b_i"], params["b_f"],
                         params["b_o"], params["b_c"]]).reshape(1, -1).astype(jnp.float32)
    w_xh = jnp.concatenate([wx, wh], axis=0)      # [Wx; Wh] packed along K
    return {"wx": wx, "wh": wh, "w_xh": w_xh, "b": b}


def _input_projection(x2d, wx, b):
    """pre_x = x2d @ Wx + b  (x2d: (T*B, in)).  One dense MXU-friendly matmul."""
    M = x2d.shape[0]
    N = wx.shape[1]
    vmem = pl.BlockSpec(memory_space=pltpu.MemorySpace.VMEM)
    # TODO(synk): for large T*B this matmul should be tiled over rows with a
    # grid; at these shapes a single whole-array block is optimal.
    return pl.pallas_call(
        _input_proj_kernel,
        out_shape=jax.ShapeDtypeStruct((M, N), jnp.float32),
        in_specs=[vmem] * 3,
        out_specs=vmem,
    )(x2d, wx, b)


def lstm_block_forward(x, h_t, c_t, packed):
    """One LSTM cell step (matches PyTorch LSTMBlock.forward). Returns (h, c).

    NOTE: do not call this inside a Python/scan loop over time — it re-DMAs the
    weights and pays a pallas_call launch per step.  Use lstm_sequence_forward
    for sequences (weights stay resident, h/c stay in VMEM).
    """
    B = x.shape[0]
    H = h_t.shape[1]
    xh = jnp.concatenate([x, h_t], axis=1)        # fuse the two matmuls along K

    kernel = functools.partial(_lstm_cell_kernel, hidden_size=H)
    vmem = pl.BlockSpec(memory_space=pltpu.MemorySpace.VMEM)

    h_new, c_new = pl.pallas_call(
        kernel,
        out_shape=(jax.ShapeDtypeStruct((B, H), x.dtype),
                   jax.ShapeDtypeStruct((B, H), x.dtype)),
        in_specs=[vmem] * 4,
        out_specs=(vmem, vmem),
    )(xh, c_t, packed["w_xh"], packed["b"])
    return h_new, c_new


def lstm_sequence_forward(x_seq, h0, c0, packed, *, chunk=8):
    """Run the cell over a whole sequence.

    x_seq: (T, B, input_size).  Returns (h_seq (T, B, H), c_T (B, H)).
    The x projection (+bias) is precomputed for all T steps in one matmul; the
    recurrent kernel runs grid=(T//chunk,) with `chunk` steps unrolled per grid
    iteration, Wh resident in VMEM and h/c carried in VMEM scratch.
    """
    T, B, in_size = x_seq.shape
    H = h0.shape[1]
    chunk = max(1, math.gcd(int(T), int(chunk)))  # largest divisor of T <= chunk

    # (1) Hoisted input projection: one dense (T*B, in) x (in, 4H) matmul.
    pre_x = _input_projection(x_seq.reshape(T * B, in_size),
                              packed["wx"], packed["b"]).reshape(T, B, 4 * H)

    kernel = functools.partial(_lstm_seq_kernel, hidden_size=H, chunk=chunk)

    grid_spec = pltpu.PrefetchScalarGridSpec(
        num_scalar_prefetch=0,
        grid=(T // chunk,),
        in_specs=[
            pl.BlockSpec((chunk, B, 4 * H), lambda t: (t, 0, 0)),  # pre_x chunk (pipelined)
            pl.BlockSpec((B, H), lambda t: (0, 0)),                # h0 (resident)
            pl.BlockSpec((B, H), lambda t: (0, 0)),                # c0 (resident)
            pl.BlockSpec((H, 4 * H), lambda t: (0, 0)),            # Wh (resident)
        ],
        out_specs=[
            pl.BlockSpec((1, B, chunk * H), lambda t: (t, 0, 0)),  # lane-dense h slab
            pl.BlockSpec((B, H), lambda t: (0, 0)),                # final c
        ],
        scratch_shapes=[
            pltpu.VMEM((B, H), jnp.float32),   # carried h
            pltpu.VMEM((B, H), jnp.float32),   # carried c
        ],
    )

    h_slab, c_T = pl.pallas_call(
        kernel,
        grid_spec=grid_spec,
        out_shape=(
            jax.ShapeDtypeStruct((T // chunk, B, chunk * H), x_seq.dtype),
            jax.ShapeDtypeStruct((B, H), x_seq.dtype),
        ),
        compiler_params=pltpu.CompilerParams(
            dimension_semantics=("arbitrary",)),   # recurrence -> sequential grid
    )(pre_x, h0, c0, packed["wh"])

    # Undo the lane-dense slab layout: (T//Tc, B, Tc*H) -> (T, B, H).
    h_seq = (h_slab.reshape(T // chunk, B, chunk, H)
                   .transpose(0, 2, 1, 3)
                   .reshape(T, B, H))
    return h_seq, c_T


# ----------------------------------------------------------------------------
# Init + pure-JAX reference (mirrors the PyTorch module)
# ----------------------------------------------------------------------------

def init_lstm_params(key, input_size, hidden_size, dtype=jnp.float32):
    """Re-implementation of LSTMBlock.init_weights (uniform(-stdv, stdv))."""
    stdv = 1.0 / math.sqrt(hidden_size)
    names_shapes = [
        ("W_xi", (input_size, hidden_size)), ("W_hi", (hidden_size, hidden_size)),
        ("b_i", (hidden_size,)),
        ("W_xf", (input_size, hidden_size)), ("W_hf", (hidden_size, hidden_size)),
        ("b_f", (hidden_size,)),
        ("W_xc", (input_size, hidden_size)), ("W_hc", (hidden_size, hidden_size)),
        ("b_c", (hidden_size,)),
        ("W_xo", (input_size, hidden_size)), ("W_ho", (hidden_size, hidden_size)),
        ("b_o", (hidden_size,)),
    ]
    keys = jax.random.split(key, len(names_shapes))
    params = {}
    for (name, shape), k in zip(names_shapes, keys):
        params[name] = jax.random.uniform(k, shape, dtype=dtype,
                                          minval=-stdv, maxval=stdv)
    return params


def _reference_forward(x, h_t, c_t, p):
    i_t = jax.nn.sigmoid(x @ p["W_xi"] + h_t @ p["W_hi"] + p["b_i"])
    f_t = jax.nn.sigmoid(x @ p["W_xf"] + h_t @ p["W_hf"] + p["b_f"])
    g_t = jnp.tanh(x @ p["W_xc"] + h_t @ p["W_hc"] + p["b_c"])
    o_t = jax.nn.sigmoid(x @ p["W_xo"] + h_t @ p["W_ho"] + p["b_o"])
    c_new = f_t * c_t + i_t * g_t
    h_new = o_t * jnp.tanh(c_new)
    return h_new, c_new


# ----------------------------------------------------------------------------
# Demo / correctness check
# ----------------------------------------------------------------------------

if __name__ == "__main__":
    batch = 4
    input_size = 16
    hidden_size = 32      # 4H = 128 lanes; chunk*H = 256 lanes per writeback
    seq_len = 16
    chunk = 8

    key = jax.random.PRNGKey(0)
    k_params, k_x, k_h, k_c, k_seq = jax.random.split(key, 5)

    params = init_lstm_params(k_params, input_size, hidden_size)

    x = jax.random.normal(k_x, (batch, input_size), dtype=jnp.float32)
    h0 = jax.random.normal(k_h, (batch, hidden_size), dtype=jnp.float32)
    c0 = jax.random.normal(k_c, (batch, hidden_size), dtype=jnp.float32)
    x_seq = jax.random.normal(k_seq, (seq_len, batch, input_size), dtype=jnp.float32)

    # ---- f32 packed weights: tight check vs. the per-gate reference ----
    packed_f32 = pack_lstm_params(params, weight_dtype=jnp.float32)

    # Single cell step (matches the PyTorch forward).
    h_new, c_new = lstm_block_forward(x, h0, c0, packed_f32)
    jax.block_until_ready((h_new, c_new))
    h_ref, c_ref = _reference_forward(x, h0, c0, params)
    assert jnp.allclose(h_new, h_ref, atol=1e-5, rtol=1e-5)
    assert jnp.allclose(c_new, c_ref, atol=1e-5, rtol=1e-5)

    # Whole sequence (input projection hoisted + chunked recurrent kernel).
    h_seq, c_T = lstm_sequence_forward(x_seq, h0, c0, packed_f32, chunk=chunk)
    jax.block_until_ready((h_seq, c_T))

    h_r, c_r = h0, c0
    h_seq_ref = []
    for t in range(seq_len):
        h_r, c_r = _reference_forward(x_seq[t], h_r, c_r, params)
        h_seq_ref.append(h_r)
    h_seq_ref = jnp.stack(h_seq_ref, axis=0)

    assert jnp.allclose(h_seq, h_seq_ref, atol=1e-4, rtol=1e-4)
    assert jnp.allclose(c_T, c_r, atol=1e-4, rtol=1e-4)

    # ---- bf16 packed weights (MXU-native; f32 accumulation & gate math) ----
    packed_bf16 = pack_lstm_params(params, weight_dtype=jnp.bfloat16)
    h_seq_bf, c_T_bf = lstm_sequence_forward(x_seq, h0, c0, packed_bf16, chunk=chunk)
    jax.block_until_ready((h_seq_bf, c_T_bf))
    assert jnp.allclose(h_seq_bf, h_seq_ref, atol=6e-2, rtol=6e-2)
    assert jnp.allclose(c_T_bf, c_r, atol=6e-2, rtol=6e-2)

    print("KERNEL_OK")
</pallas_src>

<mosaic_0001>
module attributes {stable_mosaic.version = 11 : i64} {
  func.func @_lstm_cell_kernel(%arg0: memref<4x48xf32, #tpu.memory_space<vmem>>, %arg1: memref<4x32xf32, #tpu.memory_space<vmem>>, %arg2: memref<48x128xf32, #tpu.memory_space<vmem>>, %arg3: memref<1x128xf32, #tpu.memory_space<vmem>>, %arg4: memref<4x32xf32, #tpu.memory_space<vmem>>, %arg5: memref<4x32xf32, #tpu.memory_space<vmem>>) attributes {dimension_semantics = [], scalar_prefetch = 0 : i64, scratch_operands = 0 : i64, tpu.core_type = #tpu.core_type<tc>} {
    %c0 = arith.constant 0 : index
    %c0_0 = arith.constant 0 : index
    %0 = vector.load %arg1[%c0, %c0_0] : memref<4x32xf32, #tpu.memory_space<vmem>>, vector<4x32xf32>
    %c0_1 = arith.constant 0 : index
    %c0_2 = arith.constant 0 : index
    %1 = vector.load %arg0[%c0_1, %c0_2] : memref<4x48xf32, #tpu.memory_space<vmem>>, vector<4x48xf32>
    %c0_3 = arith.constant 0 : index
    %c0_4 = arith.constant 0 : index
    %2 = vector.load %arg2[%c0_3, %c0_4] : memref<48x128xf32, #tpu.memory_space<vmem>>, vector<48x128xf32>
    %cst = arith.constant dense<0.000000e+00> : vector<4x128xf32>
    %3 = tpu.matmul %1, %2, %cst {dimension_numbers = #tpu.dot_dimension_numbers<[1], [0], [0], [1], [0, 0, 1, 1], [], []>} : vector<4x48xf32>, vector<48x128xf32>, vector<4x128xf32> -> vector<4x128xf32>
    %c0_5 = arith.constant 0 : index
    %c0_6 = arith.constant 0 : index
    %4 = vector.load %arg3[%c0_5, %c0_6] : memref<1x128xf32, #tpu.memory_space<vmem>>, vector<1x128xf32>
    %5 = vector.broadcast %4 : vector<1x128xf32> to vector<4x128xf32>
    %6 = arith.addf %3, %5 : vector<4x128xf32>
    %7 = vector.extract_strided_slice %6 {offsets = [0, 0], sizes = [4, 96], strides = [1, 1]} : vector<4x128xf32> to vector<4x96xf32>
    %cst_7 = arith.constant 0.000000e+00 : f32
    %8 = vector.broadcast %cst_7 : f32 to vector<4x96xf32>
    %9 = arith.subf %8, %7 : vector<4x96xf32>
    %10 = math.exp %9 : vector<4x96xf32>
    %cst_8 = arith.constant 1.000000e+00 : f32
    %11 = vector.broadcast %cst_8 : f32 to vector<4x96xf32>
    %12 = arith.addf %11, %10 : vector<4x96xf32>
    %cst_9 = arith.constant 1.000000e+00 : f32
    %13 = vector.broadcast %cst_9 : f32 to vector<4x96xf32>
    %14 = arith.divf %13, %12 : vector<4x96xf32>
    %15 = vector.extract_strided_slice %14 {offsets = [0, 0], sizes = [4, 32], strides = [1, 1]} : vector<4x96xf32> to vector<4x32xf32>
    %16 = vector.extract_strided_slice %14 {offsets = [0, 32], sizes = [4, 32], strides = [1, 1]} : vector<4x96xf32> to vector<4x32xf32>
    %17 = vector.extract_strided_slice %14 {offsets = [0, 64], sizes = [4, 32], strides = [1, 1]} : vector<4x96xf32> to vector<4x32xf32>
    %18 = vector.extract_strided_slice %6 {offsets = [0, 96], sizes = [4, 32], strides = [1, 1]} : vector<4x128xf32> to vector<4x32xf32>
    %19 = math.tanh %18 : vector<4x32xf32>
    %20 = arith.mulf %16, %0 : vector<4x32xf32>
    %21 = arith.mulf %15, %19 : vector<4x32xf32>
    %22 = arith.addf %20, %21 : vector<4x32xf32>
    %23 = math.tanh %22 : vector<4x32xf32>
    %24 = arith.mulf %17, %23 : vector<4x32xf32>
    %c0_10 = arith.constant 0 : index
    %c0_11 = arith.constant 0 : index
    %25 = vector.load %arg4[%c0_10, %c0_11] : memref<4x32xf32, #tpu.memory_space<vmem>>, vector<4x32xf32>
    tpu.vector_store %arg4[%c0_10, %c0_11], %24 {strides = array<i32>} : memref<4x32xf32, #tpu.memory_space<vmem>>, vector<4x32xf32>,
    %c0_12 = arith.constant 0 : index
    %c0_13 = arith.constant 0 : index
    %26 = vector.load %arg5[%c0_12, %c0_13] : memref<4x32xf32, #tpu.memory_space<vmem>>, vector<4x32xf32>
    tpu.vector_store %arg5[%c0_12, %c0_13], %22 {strides = array<i32>} : memref<4x32xf32, #tpu.memory_space<vmem>>, vector<4x32xf32>,
    return
  }
}

</mosaic_0001>

<llo_original>
// kernel: tpu_custom_call.1
$region0: #{tpu_custom_call.1}
  #allocation0 [shape = 'u32[]', space=smem, size = 0x4, offset = 0x4, fixed_abs, tag = 'smem constant byte address 0x4 - core index']
  #allocation1 [shape = 'u32[144,128]{1,0:T(1,128)}', space=vmem, size = 0x12000, scoped, tag = 'internal scratch']
  %s0 = inlined_call_operand.hbm [shape: f32[4,48], index: 0, kind: input, shape index: {}]
  %s1 = inlined_call_operand.hbm [shape: f32[4,32], index: 1, kind: input, shape index: {}]
  %s2 = inlined_call_operand.hbm [shape: f32[48,128], index: 2, kind: input, shape index: {}]
  %s3 = inlined_call_operand.vmem [shape: f32[1,128], index: 3, kind: input, shape index: {}]
  %s4 = inlined_call_operand.hbm [shape: f32[4,32], index: 4, kind: output, shape index: {0}]
  %s5 = inlined_call_operand.hbm [shape: f32[4,32], index: 5, kind: output, shape index: {1}]
  %6 = xla_tuple %s4, %s5
  %s7 = sld [smem:[#allocation0]]
  $region46: #{tpu_custom_call.1} parent=0
    _
  %s9 = ssub.s32 1, %s7
  %s10 = scalar_select 0, %s9, %s7
  $region1: #{tpu_custom_call.1} parent=0
    #allocation2 [shape = 'u8[2048]{0}', space=vmem, size = 0x800, scoped, tag = 'input window, operand 0, single buffered']
    #allocation3 [shape = 's32[1]{0}', space=sflag, size = 0x4, scoped, tag = 'scoped memory for tpu_custom_call.1']
    #allocation4 [shape = 's32[1]{0}', space=sflag, size = 0x4, scoped, tag = 'scoped memory for tpu_custom_call.1']
    #allocation5 [shape = 'u8[2048]{0}', space=vmem, size = 0x800, scoped, tag = 'input window, operand 1, single buffered']
    #allocation6 [shape = 's32[1]{0}', space=sflag, size = 0x4, scoped, tag = 'scoped memory for tpu_custom_call.1']
    #allocation7 [shape = 'u8[24576]{0}', space=vmem, size = 0x6000, scoped, tag = 'input window, operand 2, single buffered']
    #allocation8 [shape = 'u8[2048]{0}', space=vmem, size = 0x800, scoped, tag = 'output window, operand 0, single buffered']
    #allocation9 [shape = 'u8[2048]{0}', space=vmem, size = 0x800, scoped, tag = 'output window, operand 1, single buffered']
    #allocation10 [shape = 's32[1]{0}', space=sflag, size = 0x4, scoped, tag = 'scoped memory for tpu_custom_call.1']
    %11 = vsyncpa [#allocation3], 0
    %12 = vsyncpa [#allocation6], 0
    %13 = vsyncpa [#allocation4], 0
    %14 = vsyncpa [#allocation10], 0
    // Predicated region
    $region2: #{tpu_custom_call.1} parent=1 // pred_check
      _
    $region3: #{tpu_custom_call.1} parent=1 // pred_check_branch
      %16 = sbr.rel (0) target = $region5
    $region4: #{tpu_custom_call.1} parent=1 // pred_region
      %s18 = ssub.s32 64, 64
      %19 = vsyncadd [#allocation3], %s18
      %s21 = sshll.u32 [#allocation2], 4
      %s22 = int_to_ptr.vmem [resolvable:$true] %s21
      %24 = dma.hbm_to_vmem [thread:$0]  %s0, 64, %s22, [#allocation3]
    $region5: #{tpu_custom_call.1} parent=1 // pred_fallthru
      _
    // Predicated region
    $region6: #{tpu_custom_call.1} parent=1 // pred_check
      _
    $region7: #{tpu_custom_call.1} parent=1 // pred_check_branch
      %26 = sbr.rel (0) target = $region9
    $region8: #{tpu_custom_call.1} parent=1 // pred_region
      %s28 = ssub.s32 64, 64
      %29 = vsyncadd [#allocation6], %s28
      %s31 = sshll.u32 [#allocation5], 4
      %s32 = int_to_ptr.vmem [resolvable:$true] %s31
      %34 = dma.hbm_to_vmem [thread:$0]  %s1, 64, %s32, [#allocation6]
    $region9: #{tpu_custom_call.1} parent=1 // pred_fallthru
      _
    // Predicated region
    $region10: #{tpu_custom_call.1} parent=1 // pred_check
      _
    $region11: #{tpu_custom_call.1} parent=1 // pred_check_branch
      %36 = sbr.rel (0) target = $region13
    $region12: #{tpu_custom_call.1} parent=1 // pred_region
      %s38 = ssub.s32 768, 768
      %39 = vsyncadd [#allocation6], %s38
      %s40 = sshll.u32 [#allocation7], 4
      %s41 = int_to_ptr.vmem [resolvable:$true] %s40
      %46 = dma.hbm_to_vmem [thread:$0]  %s2, 768, %s41, [#allocation6], 128, 128, 8
    $region13: #{tpu_custom_call.1} parent=1 // pred_fallthru
      _
    // Predicated region
    $region14: #{tpu_custom_call.1} parent=1 // pred_check
      _
    $region15: #{tpu_custom_call.1} parent=1 // pred_check_branch
      %48 = sbr.rel (0) target = $region17
    $region16: #{tpu_custom_call.1} parent=1 // pred_region
      _
    $region17: #{tpu_custom_call.1} parent=1 // pred_fallthru
      _
    // Predicated region
    $region18: #{tpu_custom_call.1} parent=1 // pred_check
      _
    $region19: #{tpu_custom_call.1} parent=1 // pred_check_branch
      %50 = sbr.rel (0) target = $region21
    $region20: #{tpu_custom_call.1} parent=1 // pred_region
      %51 = dma.done [#allocation3], 64
    $region21: #{tpu_custom_call.1} parent=1 // pred_fallthru
      _
    // Predicated region
    $region22: #{tpu_custom_call.1} parent=1 // pred_check
      _
    $region23: #{tpu_custom_call.1} parent=1 // pred_check_branch
      %53 = sbr.rel (0) target = $region25
    $region24: #{tpu_custom_call.1} parent=1 // pred_region
      %54 = dma.done [#allocation6], 64
    $region25: #{tpu_custom_call.1} parent=1 // pred_fallthru
      _
    // Predicated region
    $region26: #{tpu_custom_call.1} parent=1 // pred_check
      _
    $region27: #{tpu_custom_call.1} parent=1 // pred_check_branch
      %56 = sbr.rel (0) target = $region29
    $region28: #{tpu_custom_call.1} parent=1 // pred_region
      %57 = dma.done [#allocation6], 768
    $region29: #{tpu_custom_call.1} parent=1 // pred_fallthru
      _
    %v58 = vld [vmem:[#allocation5] sm:$0xf]
    %v59 = vld [vmem:[#allocation2] sm:$0xf]
    %v60 = vld [vmem:[#allocation7] sm:$0xff]
    %v61 = vld [vmem:[#allocation7 + $0x8] sm:$0xff]
    %v62 = vld [vmem:[#allocation7 + $0x10] sm:$0xff]
    %v63 = vld [vmem:[#allocation7 + $0x18] sm:$0xff]
    %v64 = vld [vmem:[#allocation7 + $0x20] sm:$0xff]
    %v65 = vld [vmem:[#allocation7 + $0x28] sm:$0xff]
    %v66 = vld [vmem:[%s3] sm:$0x1]
    %v68 = vlaneseq
    %v69 = vshrl.u32 %v68, 7
    %v70 = vsub.s32 0, %v69
    %v71 = vrot.slane %v66, %v70
    %vm73 = vcmask 392192
    %v75 = vsel %vm73, %v59, 0
    %77 = vmatprep.subr.mxu0 0.0
    %78 = vmatpush1.msra.mxu0 %v60
    %79 = vmatprep.subr.mxu0 0.0
    %80 = vmatpush1.msra.mxu0 %v61
    %81 = vmatprep.subr.mxu0 0.0
    %82 = vmatpush1.msra.mxu0 %v62
    %83 = vmatprep.subr.mxu0 0.0
    %84 = vmatpush1.msra.mxu0 %v63
    %85 = vmatprep.subr.mxu0 0.0
    %86 = vmatpush1.msra.mxu0 %v64
    %87 = vmatprep.subr.mxu0 0.0
    %88 = vmatpush1.msra.mxu0 %v65
    %89 = vmatprep.subr.mxu0 0.0
    %90 = vmatpush1.msra.mxu0 0.0
    %91 = vmatprep.subr.mxu0 0.0
    %92 = vmatpush1.msra.mxu0 0.0
    %93 = vmatprep.subr.mxu0 0.0
    %94 = vmatpush1.msra.mxu0 0.0
    %95 = vmatprep.subr.mxu0 0.0
    %96 = vmatpush1.msra.mxu0 0.0
    %97 = vmatprep.subr.mxu0 0.0
    %98 = vmatpush1.msra.mxu0 0.0
    %99 = vmatprep.subr.mxu0 0.0
    %100 = vmatpush1.msra.mxu0 0.0
    %101 = vmatprep.subr.mxu0 0.0
    %102 = vmatpush1.msra.mxu0 0.0
    %103 = vmatprep.subr.mxu0 0.0
    %104 = vmatpush1.msra.mxu0 0.0
    %105 = vmatprep.subr.mxu0 0.0
    %106 = vmatpush1.msra.mxu0 0.0
    %107 = vmatprep.subr.mxu0 0.0
    %108 = vmatpush1.msra.mxu0 0.0
    %109 = vmatprep.subr.mxu0 0.0
    %110 = vmatpush1.msra.mxu0 0.0
    %111 = vmatprep.subr.mxu0 0.0
    %112 = vmatpush1.msra.mxu0 0.0
    %113 = vmatprep.subr.mxu0 0.0
    %114 = vmatpush1.msra.mxu0 0.0
    %115 = vmatprep.subr.mxu0 0.0
    %116 = vmatpush1.msra.mxu0 0.0
    %117 = vmatprep.subr.mxu0 0.0
    %118 = vmatpush1.msra.mxu0 0.0
    %119 = vmatprep.subr.mxu0 0.0
    %120 = vmatpush1.msra.mxu0 0.0
    %121 = vmatprep.subr.mxu0 0.0
    %122 = vmatpush1.msra.mxu0 0.0
    %123 = vmatprep.subr.mxu0 0.0
    %124 = vmatpush1.msra.mxu0 0.0
    %125 = vmatprep.subr.mxu0 0.0
    %126 = vmatpush1.msra.mxu0 0.0
    %127 = vmatprep.subr.mxu0 0.0
    %128 = vmatpush1.msra.mxu0 0.0
    %129 = vmatprep.subr.mxu0 0.0
    %130 = vmatpush1.msra.mxu0 0.0
    %131 = vmatprep.subr.mxu0 0.0
    %132 = vmatpush1.msra.mxu0 0.0
    %133 = vmatprep.subr.mxu0 0.0
    %134 = vmatpush1.msra.mxu0 0.0
    %135 = vmatprep.subr.mxu0 0.0
    %136 = vmatpush1.msra.mxu0 0.0
    %137 = vmatprep.subr.mxu0 0.0
    %138 = vmatpush1.msra.mxu0 0.0
    %139 = vmatprep.subr.mxu0 0.0
    %140 = vmatpush1.msra.mxu0 0.0
    %141 = vmatprep.mubr.f32.mxu0 0.0
    %142 = vmatmul.mubr.f32.gmra.mrb[0].mxu0 %v75
    %v143 = vpop.f32.mrb[0].mxu0
    %v144 = vadd.f32 %v71, %v143
    %v145 = vpop.f32.mrb[0].mxu0
    %146 = vdwg.mxu0
    %v147 = vsub.f32 0.0, %v144
    %v148 = vmul.f32 %v147, 1.442695
    %v149 = vpow.pop %v148
    %v150 = vadd.f32 %v149, 1.0
    %v151 = vrcp.pop %v150
    %v152 = vmul.f32 1.0, %v151
    %v153 = vtanh.pop %v144
    %155 = vrot.lane.b32.xlu0 %v58, 32
    %v156 = vpop.permute.xlu0 %155
    %v158 = vmul.f32 %v152, %v156
    %160 = vrot.lane.b32.xlu0 %v153, 32
    %v161 = vpop.permute.xlu0 %160
    %v163 = vmul.f32 %v152, %v161
    %165 = vrot.lane.b32.xlu0 %v163, 32
    %v166 = vpop.permute.xlu0 %165
    %v168 = vadd.f32 %v158, %v166
    %v169 = vtanh.pop %v168
    %171 = vrot.lane.b32.xlu0 %v169, 32
    %v172 = vpop.permute.xlu0 %171
    %v174 = vmul.f32 %v152, %v172
    %176 = vrot.lane.b32.xlu0 %v174, 64
    %v177 = vpop.permute.xlu0 %176
    %vm179 = vcmask 257024
    %180 = vst.msk [vmem:[#allocation8] sm:$0xf] %vm179, %v177
    %182 = vrot.lane.b32.xlu0 %v168, 96
    %v183 = vpop.permute.xlu0 %182
    %185 = vst.msk [vmem:[#allocation9] sm:$0xf] %vm179, %v183
    // Predicated region
    $region30: #{tpu_custom_call.1} parent=1 // pred_check
      _
    $region31: #{tpu_custom_call.1} parent=1 // pred_check_branch
      %187 = sbr.rel (0) target = $region33
    $region32: #{tpu_custom_call.1} parent=1 // pred_region
      %s189 = ssub.s32 64, 64
      %190 = vsyncadd [#allocation4], %s189
      %s192 = sshll.u32 [#allocation8], 4
      %s193 = int_to_ptr.vmem [resolvable:$true] %s192
      %195 = dma.vmem_to_hbm [thread:$0]  %s193, 64, %s4, [#allocation4]
    $region33: #{tpu_custom_call.1} parent=1 // pred_fallthru
      _
    // Predicated region
    $region34: #{tpu_custom_call.1} parent=1 // pred_check
      _
    $region35: #{tpu_custom_call.1} parent=1 // pred_check_branch
      %197 = sbr.rel (0) target = $region37
    $region36: #{tpu_custom_call.1} parent=1 // pred_region
      %s199 = ssub.s32 64, 64
      %200 = vsyncadd [#allocation10], %s199
      %s202 = sshll.u32 [#allocation9], 4
      %s203 = int_to_ptr.vmem [resolvable:$true] %s202
      %205 = dma.vmem_to_hbm [thread:$0]  %s203, 64, %s5, [#allocation10]
    $region37: #{tpu_custom_call.1} parent=1 // pred_fallthru
      _
    // Predicated region
    $region38: #{tpu_custom_call.1} parent=1 // pred_check
      _
    $region39: #{tpu_custom_call.1} parent=1 // pred_check_branch
      %207 = sbr.rel (0) target = $region41
    $region40: #{tpu_custom_call.1} parent=1 // pred_region
      %208 = dma.done [#allocation4], 64
    $region41: #{tpu_custom_call.1} parent=1 // pred_fallthru
      _
    // Predicated region
    $region42: #{tpu_custom_call.1} parent=1 // pred_check
      _
    $region43: #{tpu_custom_call.1} parent=1 // pred_check_branch
      %210 = sbr.rel (0) target = $region45
    $region44: #{tpu_custom_call.1} parent=1 // pred_region
      %211 = dma.done [#allocation10], 64
    $region45: #{tpu_custom_call.1} parent=1 // pred_fallthru
      _
    %212 = vsyncpa [#allocation3], 1
    %213 = vsyncpa [#allocation6], 1
    %214 = vsyncpa [#allocation4], 1
    %215 = vsyncpa [#allocation10], 1

</llo_original>
